<compile_context>
chip_gen: v6e
topology: v6e:2x2x1
jax: 0.10.0
libtpu: 0.0.40
codegen_flags: <defaults>
</compile_context>

<pallas_src>
import jax
import jax.numpy as jnp
from jax.experimental import pallas as pl
from jax.experimental.pallas import tpu as pltpu


def _round_up(x: int, m: int) -> int:
    return ((x + m - 1) // m) * m


def make_stratified_raysampler(n_pts_per_ray: int,
                               min_depth: float,
                               max_depth: float,
                               tile_rays: int = 512):
    P = int(n_pts_per_ray)

    def kernel(z_ref, o_ref, d_ref, pts_ref):
        # z_ref   : (1, P, 1)   depths (resident; constant index_map)
        # o_ref   : (3, TN)     origins tile, ray axis on lanes
        # d_ref   : (3, TN)     directions tile, ray axis on lanes
        # pts_ref : (3, P, TN)  points tile, ray axis on lanes (lane-dense vst)
        z = z_ref[...]                      # (1, P, 1)
        o = o_ref[...][:, None, :]          # (3, 1, TN)
        d = d_ref[...][:, None, :]          # (3, 1, TN)
        pts_ref[...] = o + z * d            # (3, P, TN)  fused mul-add on VPU

    def forward(origins, directions):
        origins = origins.astype(jnp.float32)
        directions = directions.astype(jnp.float32)
        N = origins.shape[0]

        # torch.linspace semantics (P == 1 -> [min_depth]).
        z = jnp.linspace(jnp.float32(min_depth), jnp.float32(max_depth), P
                         ).astype(jnp.float32)

        # Pad the ray count to a lane-friendly multiple; no divisibility
        # requirement on the caller's N.
        n_pad = _round_up(max(N, 1), 128)
        TN = _round_up(min(int(tile_rays), n_pad), 128)
        n_pad = _round_up(n_pad, TN)

        # Transpose inputs so the ray axis lands on TPU lanes (tiny traffic
        # compared with the (3, P, N) output).
        o_t = jnp.zeros((3, n_pad), jnp.float32).at[:, :N].set(origins.T)
        d_t = jnp.zeros((3, n_pad), jnp.float32).at[:, :N].set(directions.T)
        z3 = z.reshape(1, P, 1)

        pts = pl.pallas_call(
            kernel,
            out_shape=jax.ShapeDtypeStruct((3, P, n_pad), jnp.float32),
            grid_spec=pltpu.PrefetchScalarGridSpec(
                num_scalar_prefetch=0,
                grid=(n_pad // TN,),
                in_specs=[
                    pl.BlockSpec((1, P, 1), lambda i: (0, 0, 0)),  # z (resident)
                    pl.BlockSpec((3, TN), lambda i: (0, i)),       # origins^T
                    pl.BlockSpec((3, TN), lambda i: (0, i)),       # directions^T
                ],
                out_specs=pl.BlockSpec((3, P, TN), lambda i: (0, 0, i)),
            ),
            compiler_params=pltpu.CompilerParams(
                dimension_semantics=("parallel",)),
        )(z3, o_t, d_t)

        # PyTorch-convention outputs.  The permute below is pure layout
        # plumbing; downstream kernels that can consume (3, P, N) directly
        # should use `pts` and skip it.
        sample_points = jnp.transpose(pts[:, :, :N], (2, 1, 0))     # (N, P, 3)
        sample_lengths = jnp.broadcast_to(z, (N, P))[..., None]     # (N, P, 1)
        return sample_points, sample_lengths

    return forward


if __name__ == "__main__":
    # cfg (deterministic, in-script)
    N_PTS_PER_RAY = 64
    MIN_DEPTH = 0.1
    MAX_DEPTH = 5.0

    key = jax.random.PRNGKey(0)
    k1, k2 = jax.random.split(key)
    N = 16  # number of rays (deliberately NOT a multiple of the tile -> padding path)
    origins = jax.random.normal(k1, (N, 3), jnp.float32)
    directions = jax.random.normal(k2, (N, 3), jnp.float32)
    directions = directions / jnp.linalg.norm(directions, axis=-1, keepdims=True)

    sampler = make_stratified_raysampler(N_PTS_PER_RAY, MIN_DEPTH, MAX_DEPTH)
    sample_points, sample_lengths = sampler(origins, directions)
    sample_points = jax.block_until_ready(sample_points)
    sample_lengths = jax.block_until_ready(sample_lengths)

    # pure-JAX reference (mirrors the PyTorch forward exactly)
    z = jnp.linspace(MIN_DEPTH, MAX_DEPTH, N_PTS_PER_RAY)
    ref_pts = jnp.transpose(origins[..., None] + z * directions[..., None], (0, 2, 1))
    ref_len = (z * jnp.ones((N,), jnp.float32)[:, None])[..., None]

    assert sample_points.shape == (N, N_PTS_PER_RAY, 3)
    assert sample_lengths.shape == (N, N_PTS_PER_RAY, 1)
    assert jnp.allclose(sample_points, ref_pts, atol=1e-5)
    assert jnp.allclose(sample_lengths, ref_len, atol=1e-5)
    print("KERNEL_OK")
</pallas_src>

<mosaic_0001>
module attributes {stable_mosaic.version = 11 : i64} {
  func.func @kernel(%arg0: i32, %arg1: memref<1x64x1xf32, #tpu.memory_space<vmem>>, %arg2: memref<3x128xf32, #tpu.memory_space<vmem>>, %arg3: memref<3x128xf32, #tpu.memory_space<vmem>>, %arg4: memref<3x64x128xf32, #tpu.memory_space<vmem>>) attributes {dimension_semantics = [#tpu.dimension_semantics<parallel>], iteration_bounds = array<i64: 1>, scalar_prefetch = 0 : i64, scratch_operands = 0 : i64, tpu.core_type = #tpu.core_type<tc>, window_params = [{pipeline_mode = #tpu.pipeline_mode<synchronous>, transform_indices = @transform_0, window_bounds = array<i64: 1, 64, 1>}, {transform_indices = @transform_1, window_bounds = array<i64: 3, 128>}, {transform_indices = @transform_2, window_bounds = array<i64: 3, 128>}, {transform_indices = @transform_3, window_bounds = array<i64: 3, 64, 128>}]} {
    %c0 = arith.constant 0 : index
    %c0_0 = arith.constant 0 : index
    %c0_1 = arith.constant 0 : index
    %0 = vector.load %arg1[%c0, %c0_0, %c0_1] : memref<1x64x1xf32, #tpu.memory_space<vmem>>, vector<1x64x1xf32>
    %c0_2 = arith.constant 0 : index
    %c0_3 = arith.constant 0 : index
    %1 = vector.load %arg2[%c0_2, %c0_3] : memref<3x128xf32, #tpu.memory_space<vmem>>, vector<3x128xf32>
    %2 = vector.shape_cast %1 : vector<3x128xf32> to vector<3x1x128xf32>
    %c0_4 = arith.constant 0 : index
    %c0_5 = arith.constant 0 : index
    %3 = vector.load %arg3[%c0_4, %c0_5] : memref<3x128xf32, #tpu.memory_space<vmem>>, vector<3x128xf32>
    %4 = vector.shape_cast %3 : vector<3x128xf32> to vector<3x1x128xf32>
    %5 = vector.broadcast %0 : vector<1x64x1xf32> to vector<3x64x128xf32>
    %6 = vector.broadcast %4 : vector<3x1x128xf32> to vector<3x64x128xf32>
    %7 = arith.mulf %5, %6 : vector<3x64x128xf32>
    %8 = vector.broadcast %2 : vector<3x1x128xf32> to vector<3x64x128xf32>
    %9 = arith.addf %8, %7 : vector<3x64x128xf32>
    %c0_6 = arith.constant 0 : index
    %c0_7 = arith.constant 0 : index
    %c0_8 = arith.constant 0 : index
    %10 = vector.load %arg4[%c0_6, %c0_7, %c0_8] : memref<3x64x128xf32, #tpu.memory_space<vmem>>, vector<3x64x128xf32>
    tpu.vector_store %arg4[%c0_6, %c0_7, %c0_8], %9 {strides = array<i32>} : memref<3x64x128xf32, #tpu.memory_space<vmem>>, vector<3x64x128xf32>,
    return
  }
  func.func @transform_0(%arg0: i32) -> (i32, i32, i32) {
    %c0_i32 = arith.constant 0 : i32
    %c0_i32_0 = arith.constant 0 : i32
    %c0_i32_1 = arith.constant 0 : i32
    %c0_i32_2 = arith.constant 0 : i32
    return %c0_i32, %c0_i32_0, %c0_i32_1 : i32, i32, i32
  }
  func.func @transform_1(%arg0: i32) -> (i32, i32) {
    %c0_i32 = arith.constant 0 : i32
    %c0_i32_0 = arith.constant 0 : i32
    return %c0_i32, %arg0 : i32, i32
  }
  func.func @transform_2(%arg0: i32) -> (i32, i32) {
    %c0_i32 = arith.constant 0 : i32
    %c0_i32_0 = arith.constant 0 : i32
    return %c0_i32, %arg0 : i32, i32
  }
  func.func @transform_3(%arg0: i32) -> (i32, i32, i32) {
    %c0_i32 = arith.constant 0 : i32
    %c0_i32_0 = arith.constant 0 : i32
    %c0_i32_1 = arith.constant 0 : i32
    return %c0_i32, %c0_i32_0, %arg0 : i32, i32, i32
  }
}

</mosaic_0001>

<llo_original>
// kernel: tpu_custom_call.1
$region0: #{tpu_custom_call.1}
  #allocation0 [shape = 'u32[]', space=smem, size = 0x4, offset = 0x4, fixed_abs, tag = 'smem constant byte address 0x4 - core index']
  #allocation1 [shape = 'u32[144,128]{1,0:T(1,128)}', space=vmem, size = 0x12000, scoped, tag = 'internal scratch']
  %s0 = inlined_call_operand.vmem [shape: f32[1,64,1], index: 0, kind: input, shape index: {}]
  %s1 = inlined_call_operand.vmem [shape: f32[3,128], index: 1, kind: input, shape index: {}]
  %s2 = inlined_call_operand.vmem [shape: f32[3,128], index: 2, kind: input, shape index: {}]
  %s3 = inlined_call_operand.hbm [shape: f32[3,64,128], index: 3, kind: output, shape index: {}]
  %s4 = sld [smem:[#allocation0]]
  $region22: #{tpu_custom_call.1} parent=0
    _
  %s6 = ssub.s32 1, %s4
  %s7 = scalar_select 0, %s6, %s4
  $region1: #{tpu_custom_call.1} parent=0
    #allocation2 [shape = 'u8[98304]{0}', space=vmem, size = 0x18000, scoped, tag = 'output window, operand 0, single buffered']
    #allocation3 [shape = 's32[1]{0}', space=sflag, size = 0x4, scoped, tag = 'scoped memory for tpu_custom_call.1']
    %8 = vsyncpa [#allocation3], 0
    // Predicated region
    $region2: #{tpu_custom_call.1} parent=1 // pred_check
      _
    $region3: #{tpu_custom_call.1} parent=1 // pred_check_branch
      %10 = sbr.rel (0) target = $region5
    $region4: #{tpu_custom_call.1} parent=1 // pred_region
      _
    $region5: #{tpu_custom_call.1} parent=1 // pred_fallthru
      _
    // Predicated region
    $region6: #{tpu_custom_call.1} parent=1 // pred_check
      _
    $region7: #{tpu_custom_call.1} parent=1 // pred_check_branch
      %12 = sbr.rel (0) target = $region9
    $region8: #{tpu_custom_call.1} parent=1 // pred_region
      _
    $region9: #{tpu_custom_call.1} parent=1 // pred_fallthru
      _
    // Predicated region
    $region10: #{tpu_custom_call.1} parent=1 // pred_check
      _
    $region11: #{tpu_custom_call.1} parent=1 // pred_check_branch
      %14 = sbr.rel (0) target = $region13
    $region12: #{tpu_custom_call.1} parent=1 // pred_region
      _
    $region13: #{tpu_custom_call.1} parent=1 // pred_fallthru
      _
    %v15 = vld [vmem:[%s0] sm:$0xff]
    %v16 = vld [vmem:[%s0 + $0x8] sm:$0xff]
    %v17 = vld [vmem:[%s0 + $0x10] sm:$0xff]
    %v18 = vld [vmem:[%s0 + $0x18] sm:$0xff]
    %v19 = vld [vmem:[%s0 + $0x20] sm:$0xff]
    %v20 = vld [vmem:[%s0 + $0x28] sm:$0xff]
    %v21 = vld [vmem:[%s0 + $0x30] sm:$0xff]
    %v22 = vld [vmem:[%s0 + $0x38] sm:$0xff]
    %v23 = vld [vmem:[%s1] sm:$0x7]
    %v26 = vunpack.c.l.s4 1966171168
    %v27 = vunpack.c.0.s8 %v26
    %v28 = vlaneseq
    %v29 = vshrl.u32 %v28, 7
    %v30 = vsub.s32 %v27, %v29
    %v31 = vrot.slane %v23, %v30
    %v32 = vcombine.high %v31, %v31
    %v34 = vunpack.c.l.s4 1966171168
    %v35 = vunpack.c.0.s8 %v34
    %v36 = vlaneseq
    %v37 = vshrl.u32 %v36, 7
    %v38 = vsub.s32 %v35, %v37
    %v39 = vrot.slane %v31, %v38
    %v41 = vunpack.c.l.s4 1966171168
    %v42 = vunpack.c.0.s8 %v41
    %v43 = vlaneseq
    %v44 = vshrl.u32 %v43, 7
    %v45 = vsub.s32 %v42, %v44
    %v46 = vrot.slane %v32, %v45
    %v47 = vcombine.high %v39, %v39
    %v48 = vld [vmem:[%s2] sm:$0x7]
    %v51 = vunpack.c.l.s4 1966171168
    %v52 = vunpack.c.0.s8 %v51
    %v53 = vlaneseq
    %v54 = vshrl.u32 %v53, 7
    %v55 = vsub.s32 %v52, %v54
    %v56 = vrot.slane %v48, %v55
    %v57 = vcombine.high %v56, %v56
    %v59 = vunpack.c.l.s4 1966171168
    %v60 = vunpack.c.0.s8 %v59
    %v61 = vlaneseq
    %v62 = vshrl.u32 %v61, 7
    %v63 = vsub.s32 %v60, %v62
    %v64 = vrot.slane %v56, %v63
    %v66 = vunpack.c.l.s4 1966171168
    %v67 = vunpack.c.0.s8 %v66
    %v68 = vlaneseq
    %v69 = vshrl.u32 %v68, 7
    %v70 = vsub.s32 %v67, %v69
    %v71 = vrot.slane %v57, %v70
    %v72 = vcombine.high %v64, %v64
    %74 = vset.pattern.permute.xlu0 0
    %75 = vperm.xlu0 %74, %v15
    %v76 = vpop.permute.xlu0 %75
    %79 = vset.pattern.permute.xlu0 0
    %80 = vperm.xlu0 %79, %v16
    %v81 = vpop.permute.xlu0 %80
    %84 = vset.pattern.permute.xlu0 0
    %85 = vperm.xlu0 %84, %v17
    %v86 = vpop.permute.xlu0 %85
    %89 = vset.pattern.permute.xlu0 0
    %90 = vperm.xlu0 %89, %v18
    %v91 = vpop.permute.xlu0 %90
    %94 = vset.pattern.permute.xlu0 0
    %95 = vperm.xlu0 %94, %v19
    %v96 = vpop.permute.xlu0 %95
    %99 = vset.pattern.permute.xlu0 0
    %100 = vperm.xlu0 %99, %v20
    %v101 = vpop.permute.xlu0 %100
    %104 = vset.pattern.permute.xlu0 0
    %105 = vperm.xlu0 %104, %v21
    %v106 = vpop.permute.xlu0 %105
    %109 = vset.pattern.permute.xlu0 0
    %110 = vperm.xlu0 %109, %v22
    %v111 = vpop.permute.xlu0 %110
    %v113 = vlaneseq
    %v114 = vshrl.u32 %v113, 7
    %v115 = vsub.s32 0, %v114
    %v116 = vrot.slane %v64, %v115
    %v117 = vlaneseq
    %v118 = vshrl.u32 %v117, 7
    %v119 = vsub.s32 0, %v118
    %v120 = vrot.slane %v71, %v119
    %v121 = vlaneseq
    %v122 = vshrl.u32 %v121, 7
    %v123 = vsub.s32 0, %v122
    %v124 = vrot.slane %v72, %v123
    %v128 = vmul.f32 %v76, %v116
    %v129 = vmul.f32 %v81, %v116
    %v130 = vmul.f32 %v86, %v116
    %v131 = vmul.f32 %v91, %v116
    %v132 = vmul.f32 %v96, %v116
    %v133 = vmul.f32 %v101, %v116
    %v134 = vmul.f32 %v106, %v116
    %v135 = vmul.f32 %v111, %v116
    %v136 = vmul.f32 %v76, %v120
    %v137 = vmul.f32 %v81, %v120
    %v138 = vmul.f32 %v86, %v120
    %v139 = vmul.f32 %v91, %v120
    %v140 = vmul.f32 %v96, %v120
    %v141 = vmul.f32 %v101, %v120
    %v142 = vmul.f32 %v106, %v120
    %v143 = vmul.f32 %v111, %v120
    %v144 = vmul.f32 %v76, %v124
    %v145 = vmul.f32 %v81, %v124
    %v146 = vmul.f32 %v86, %v124
    %v147 = vmul.f32 %v91, %v124
    %v148 = vmul.f32 %v96, %v124
    %v149 = vmul.f32 %v101, %v124
    %v150 = vmul.f32 %v106, %v124
    %v151 = vmul.f32 %v111, %v124
    %v152 = vlaneseq
    %v153 = vshrl.u32 %v152, 7
    %v154 = vsub.s32 0, %v153
    %v155 = vrot.slane %v39, %v154
    %v156 = vlaneseq
    %v157 = vshrl.u32 %v156, 7
    %v158 = vsub.s32 0, %v157
    %v159 = vrot.slane %v46, %v158
    %v160 = vlaneseq
    %v161 = vshrl.u32 %v160, 7
    %v162 = vsub.s32 0, %v161
    %v163 = vrot.slane %v47, %v162
    %v167 = vadd.f32 %v155, %v128
    %v168 = vadd.f32 %v155, %v129
    %v169 = vadd.f32 %v155, %v130
    %v170 = vadd.f32 %v155, %v131
    %v171 = vadd.f32 %v155, %v132
    %v172 = vadd.f32 %v155, %v133
    %v173 = vadd.f32 %v155, %v134
    %v174 = vadd.f32 %v155, %v135
    %v175 = vadd.f32 %v159, %v136
    %v176 = vadd.f32 %v159, %v137
    %v177 = vadd.f32 %v159, %v138
    %v178 = vadd.f32 %v159, %v139
    %v179 = vadd.f32 %v159, %v140
    %v180 = vadd.f32 %v159, %v141
    %v181 = vadd.f32 %v159, %v142
    %v182 = vadd.f32 %v159, %v143
    %v183 = vadd.f32 %v163, %v144
    %v184 = vadd.f32 %v163, %v145
    %v185 = vadd.f32 %v163, %v146
    %v186 = vadd.f32 %v163, %v147
    %v187 = vadd.f32 %v163, %v148
    %v188 = vadd.f32 %v163, %v149
    %v189 = vadd.f32 %v163, %v150
    %v190 = vadd.f32 %v163, %v151
    %191 = vst [vmem:[#allocation2] sm:$0xff] %v167
    %192 = vst [vmem:[#allocation2 + $0x8] sm:$0xff] %v168
    %193 = vst [vmem:[#allocation2 + $0x10] sm:$0xff] %v169
    %194 = vst [vmem:[#allocation2 + $0x18] sm:$0xff] %v170
    %195 = vst [vmem:[#allocation2 + $0x20] sm:$0xff] %v171
    %196 = vst [vmem:[#allocation2 + $0x28] sm:$0xff] %v172
    %197 = vst [vmem:[#allocation2 + $0x30] sm:$0xff] %v173
    %198 = vst [vmem:[#allocation2 + $0x38] sm:$0xff] %v174
    %199 = vst [vmem:[#allocation2 + $0x40] sm:$0xff] %v175
    %200 = vst [vmem:[#allocation2 + $0x48] sm:$0xff] %v176
    %201 = vst [vmem:[#allocation2 + $0x50] sm:$0xff] %v177
    %202 = vst [vmem:[#allocation2 + $0x58] sm:$0xff] %v178
    %203 = vst [vmem:[#allocation2 + $0x60] sm:$0xff] %v179
    %204 = vst [vmem:[#allocation2 + $0x68] sm:$0xff] %v180
    %205 = vst [vmem:[#allocation2 + $0x70] sm:$0xff] %v181
    %206 = vst [vmem:[#allocation2 + $0x78] sm:$0xff] %v182
    %207 = vst [vmem:[#allocation2 + $0x80] sm:$0xff] %v183
    %208 = vst [vmem:[#allocation2 + $0x88] sm:$0xff] %v184
    %209 = vst [vmem:[#allocation2 + $0x90] sm:$0xff] %v185
    %210 = vst [vmem:[#allocation2 + $0x98] sm:$0xff] %v186
    %211 = vst [vmem:[#allocation2 + $0xa0] sm:$0xff] %v187
    %212 = vst [vmem:[#allocation2 + $0xa8] sm:$0xff] %v188
    %213 = vst [vmem:[#allocation2 + $0xb0] sm:$0xff] %v189
    %214 = vst [vmem:[#allocation2 + $0xb8] sm:$0xff] %v190
    // Predicated region
    $region14: #{tpu_custom_call.1} parent=1 // pred_check
      _
    $region15: #{tpu_custom_call.1} parent=1 // pred_check_branch
      %216 = sbr.rel (0) target = $region17
    $region16: #{tpu_custom_call.1} parent=1 // pred_region
      %s218 = ssub.s32 3072, 3072
      %219 = vsyncadd [#allocation3], %s218
      %s220 = sshll.u32 [#allocation2], 4
      %s221 = int_to_ptr.vmem [resolvable:$true] %s220
      %226 = dma.vmem_to_hbm [thread:$0]  %s221, 3072, %s3, [#allocation3], 128, 128, 8
    $region17: #{tpu_custom_call.1} parent=1 // pred_fallthru
      _
    // Predicated region
    $region18: #{tpu_custom_call.1} parent=1 // pred_check
      _
    $region19: #{tpu_custom_call.1} parent=1 // pred_check_branch
      %228 = sbr.rel (0) target = $region21
    $region20: #{tpu_custom_call.1} parent=1 // pred_region
      %229 = dma.done [#allocation3], 3072
    $region21: #{tpu_custom_call.1} parent=1 // pred_fallthru
      _
    %230 = vsyncpa [#allocation3], 1

</llo_original>
